<compile_context>
chip_gen: v5e
topology: v5e:2x2
jax: 0.10.0
libtpu: 0.0.40
codegen_flags: <defaults>
</compile_context>

<pallas_src>
import jax
import jax.numpy as jnp
from jax.experimental import pallas as pl
from jax.experimental.pallas import tpu as pltpu


def _mlp_kernel(w1_ref, b1_ref, w2_ref, b2_ref, xT_ref, oT_ref):
    # w1_ref (8,), b1_ref (4,), w2_ref (4,), b2_ref (1,) are f32 scalars in SMEM.
    # xT_ref: (2, TILE_B) f32 in VMEM, batch on lanes.  oT_ref: (1, TILE_B).
    x0 = xT_ref[0:1, :]            # (1, TILE_B)
    x1 = xT_ref[1:2, :]            # (1, TILE_B)

    acc = jnp.zeros_like(x0)
    # Unrolled over the 4 hidden units: pure VPU broadcast-FMAs + relu.
    # h_j = relu(x0 * W1[j,0] + x1 * W1[j,1] + b1[j]);  acc += h_j * W2[0,j]
    for j in range(4):
        h_j = x0 * w1_ref[2 * j] + x1 * w1_ref[2 * j + 1] + b1_ref[j]
        h_j = jnp.maximum(h_j, 0.0)
        acc = acc + h_j * w2_ref[j]
    y = acc + b2_ref[0]

    # sigmoid(y) = 1 / (1 + exp(-y)); exp and approx reciprocal both run on the EUP.
    e = jnp.exp(-y)
    oT_ref[...] = pl.reciprocal(1.0 + e, approx=True).astype(oT_ref.dtype)


def mlp_forward(x, w1, b1, w2, b2, *, tile_b=2048):
    """x: (B, 2) f32.  w1: (4, 2), b1: (4,), w2: (1, 4), b2: (1,) — PyTorch Linear layout.

    Returns sigmoid(relu(x @ w1.T + b1) @ w2.T + b2) with shape (B, 1).
    """
    B = x.shape[0]

    # Lane-dense layout: batch on lanes.
    xT = x.T.astype(jnp.float32)                          # (2, B)

    # Lane-dense tiles: multiple of 128, clamped for small batches so we don't
    # over-pad; production batches get the large (double-buffered) tile.
    tile_b = max(128, min(int(tile_b), pl.cdiv(B, 128) * 128))
    b_pad = pl.cdiv(B, tile_b) * tile_b
    if b_pad != B:
        xT = jnp.pad(xT, ((0, 0), (0, b_pad - B)))
    n_tiles = b_pad // tile_b

    # 13 weight scalars, flattened for SMEM scalar prefetch (loaded once, no
    # per-step padded VMEM weight tiles).
    w1f = w1.reshape(-1).astype(jnp.float32)              # (8,)
    b1f = b1.reshape(-1).astype(jnp.float32)              # (4,)
    w2f = w2.reshape(-1).astype(jnp.float32)              # (4,)
    b2f = b2.reshape(-1).astype(jnp.float32)              # (1,)

    yT = pl.pallas_call(
        _mlp_kernel,
        out_shape=jax.ShapeDtypeStruct((1, b_pad), jnp.float32),
        grid_spec=pltpu.PrefetchScalarGridSpec(
            num_scalar_prefetch=4,
            grid=(n_tiles,),
            # index_maps receive the prefetch refs as trailing positional args.
            in_specs=[pl.BlockSpec((2, tile_b), lambda i, *prefetch: (0, i))],
            out_specs=pl.BlockSpec((1, tile_b), lambda i, *prefetch: (0, i)),
        ),
        compiler_params=pltpu.CompilerParams(
            dimension_semantics=("parallel",),            # megacore / v7x 2-TC sharding
        ),
    )(w1f, b1f, w2f, b2f, xT)

    return yT[:, :B].T                                    # (B, 1)


def init_params(key):
    """Deterministic synthetic init matching nn.Linear parameter shapes."""
    k1, k2, k3, k4 = jax.random.split(key, 4)
    lim1 = 1.0 / jnp.sqrt(2.0)
    w1 = jax.random.uniform(k1, (4, 2), jnp.float32, -lim1, lim1)   # Linear(2,4).weight
    b1 = jax.random.uniform(k2, (4,), jnp.float32, -lim1, lim1)     # Linear(2,4).bias
    lim2 = 1.0 / jnp.sqrt(4.0)
    w2 = jax.random.uniform(k3, (1, 4), jnp.float32, -lim2, lim2)   # Linear(4,1).weight
    b2 = jax.random.uniform(k4, (1,), jnp.float32, -lim2, lim2)     # Linear(4,1).bias
    return w1, b1, w2, b2


if __name__ == "__main__":
    key = jax.random.PRNGKey(0)
    k_params, k_x1, k_x2 = jax.random.split(key, 3)
    w1, b1, w2, b2 = init_params(k_params)

    def ref(x):
        h = jnp.maximum(x @ w1.T + b1, 0.0)
        return jax.nn.sigmoid(h @ w2.T + b2)

    # Case 1: batch spanning multiple grid tiles (2 tiles of 128 lanes).
    x_big = jax.random.normal(k_x1, (256, 2), jnp.float32)
    out_big = jax.block_until_ready(mlp_forward(x_big, w1, b1, w2, b2, tile_b=128))
    assert out_big.shape == (256, 1)
    assert jnp.allclose(out_big, ref(x_big), atol=2e-3, rtol=2e-3)

    # Case 2: tiny ragged batch exercising the lane-padding path.
    x_small = jax.random.normal(k_x2, (8, 2), jnp.float32)
    out_small = jax.block_until_ready(mlp_forward(x_small, w1, b1, w2, b2))
    assert out_small.shape == (8, 1)
    assert jnp.allclose(out_small, ref(x_small), atol=2e-3, rtol=2e-3)

    print("KERNEL_OK")
</pallas_src>

<mosaic_0001>
module attributes {stable_mosaic.version = 11 : i64} {
  func.func @_mlp_kernel(%arg0: i32, %arg1: memref<8xf32, #tpu.memory_space<smem>>, %arg2: memref<4xf32, #tpu.memory_space<smem>>, %arg3: memref<4xf32, #tpu.memory_space<smem>>, %arg4: memref<1xf32, #tpu.memory_space<smem>>, %arg5: memref<2x128xf32, #tpu.memory_space<vmem>>, %arg6: memref<1x128xf32, #tpu.memory_space<vmem>>) attributes {dimension_semantics = [#tpu.dimension_semantics<parallel>], iteration_bounds = array<i64: 2>, scalar_prefetch = 4 : i64, scratch_operands = 0 : i64, tpu.core_type = #tpu.core_type<tc>, window_params = [{transform_indices = @transform_0, window_bounds = array<i64: 2, 128>}, {transform_indices = @transform_1, window_bounds = array<i64: 1, 128>}]} {
    %c0 = arith.constant 0 : index
    %c0_0 = arith.constant 0 : index
    %0 = vector.load %arg5[%c0, %c0_0] : memref<2x128xf32, #tpu.memory_space<vmem>>, vector<1x128xf32>
    %c1 = arith.constant 1 : index
    %c0_1 = arith.constant 0 : index
    %1 = vector.load %arg5[%c1, %c0_1] : memref<2x128xf32, #tpu.memory_space<vmem>>, vector<1x128xf32>
    %cst = arith.constant 0.000000e+00 : f32
    %2 = vector.broadcast %cst : f32 to vector<1x128xf32>
    %c0_2 = arith.constant 0 : index
    %3 = memref.load %arg1[%c0_2] : memref<8xf32, #tpu.memory_space<smem>>
    %4 = vector.broadcast %3 : f32 to vector<1x128xf32>
    %5 = arith.mulf %0, %4 : vector<1x128xf32>
    %c1_3 = arith.constant 1 : index
    %6 = memref.load %arg1[%c1_3] : memref<8xf32, #tpu.memory_space<smem>>
    %7 = vector.broadcast %6 : f32 to vector<1x128xf32>
    %8 = arith.mulf %1, %7 : vector<1x128xf32>
    %9 = arith.addf %5, %8 : vector<1x128xf32>
    %c0_4 = arith.constant 0 : index
    %10 = memref.load %arg2[%c0_4] : memref<4xf32, #tpu.memory_space<smem>>
    %11 = vector.broadcast %10 : f32 to vector<1x128xf32>
    %12 = arith.addf %9, %11 : vector<1x128xf32>
    %cst_5 = arith.constant 0.000000e+00 : f32
    %13 = vector.broadcast %cst_5 : f32 to vector<1x128xf32>
    %14 = arith.maximumf %12, %13 : vector<1x128xf32>
    %c0_6 = arith.constant 0 : index
    %15 = memref.load %arg3[%c0_6] : memref<4xf32, #tpu.memory_space<smem>>
    %16 = vector.broadcast %15 : f32 to vector<1x128xf32>
    %17 = arith.mulf %14, %16 : vector<1x128xf32>
    %18 = arith.addf %2, %17 : vector<1x128xf32>
    %c2 = arith.constant 2 : index
    %19 = memref.load %arg1[%c2] : memref<8xf32, #tpu.memory_space<smem>>
    %20 = vector.broadcast %19 : f32 to vector<1x128xf32>
    %21 = arith.mulf %0, %20 : vector<1x128xf32>
    %c3 = arith.constant 3 : index
    %22 = memref.load %arg1[%c3] : memref<8xf32, #tpu.memory_space<smem>>
    %23 = vector.broadcast %22 : f32 to vector<1x128xf32>
    %24 = arith.mulf %1, %23 : vector<1x128xf32>
    %25 = arith.addf %21, %24 : vector<1x128xf32>
    %c1_7 = arith.constant 1 : index
    %26 = memref.load %arg2[%c1_7] : memref<4xf32, #tpu.memory_space<smem>>
    %27 = vector.broadcast %26 : f32 to vector<1x128xf32>
    %28 = arith.addf %25, %27 : vector<1x128xf32>
    %cst_8 = arith.constant 0.000000e+00 : f32
    %29 = vector.broadcast %cst_8 : f32 to vector<1x128xf32>
    %30 = arith.maximumf %28, %29 : vector<1x128xf32>
    %c1_9 = arith.constant 1 : index
    %31 = memref.load %arg3[%c1_9] : memref<4xf32, #tpu.memory_space<smem>>
    %32 = vector.broadcast %31 : f32 to vector<1x128xf32>
    %33 = arith.mulf %30, %32 : vector<1x128xf32>
    %34 = arith.addf %18, %33 : vector<1x128xf32>
    %c4 = arith.constant 4 : index
    %35 = memref.load %arg1[%c4] : memref<8xf32, #tpu.memory_space<smem>>
    %36 = vector.broadcast %35 : f32 to vector<1x128xf32>
    %37 = arith.mulf %0, %36 : vector<1x128xf32>
    %c5 = arith.constant 5 : index
    %38 = memref.load %arg1[%c5] : memref<8xf32, #tpu.memory_space<smem>>
    %39 = vector.broadcast %38 : f32 to vector<1x128xf32>
    %40 = arith.mulf %1, %39 : vector<1x128xf32>
    %41 = arith.addf %37, %40 : vector<1x128xf32>
    %c2_10 = arith.constant 2 : index
    %42 = memref.load %arg2[%c2_10] : memref<4xf32, #tpu.memory_space<smem>>
    %43 = vector.broadcast %42 : f32 to vector<1x128xf32>
    %44 = arith.addf %41, %43 : vector<1x128xf32>
    %cst_11 = arith.constant 0.000000e+00 : f32
    %45 = vector.broadcast %cst_11 : f32 to vector<1x128xf32>
    %46 = arith.maximumf %44, %45 : vector<1x128xf32>
    %c2_12 = arith.constant 2 : index
    %47 = memref.load %arg3[%c2_12] : memref<4xf32, #tpu.memory_space<smem>>
    %48 = vector.broadcast %47 : f32 to vector<1x128xf32>
    %49 = arith.mulf %46, %48 : vector<1x128xf32>
    %50 = arith.addf %34, %49 : vector<1x128xf32>
    %c6 = arith.constant 6 : index
    %51 = memref.load %arg1[%c6] : memref<8xf32, #tpu.memory_space<smem>>
    %52 = vector.broadcast %51 : f32 to vector<1x128xf32>
    %53 = arith.mulf %0, %52 : vector<1x128xf32>
    %c7 = arith.constant 7 : index
    %54 = memref.load %arg1[%c7] : memref<8xf32, #tpu.memory_space<smem>>
    %55 = vector.broadcast %54 : f32 to vector<1x128xf32>
    %56 = arith.mulf %1, %55 : vector<1x128xf32>
    %57 = arith.addf %53, %56 : vector<1x128xf32>
    %c3_13 = arith.constant 3 : index
    %58 = memref.load %arg2[%c3_13] : memref<4xf32, #tpu.memory_space<smem>>
    %59 = vector.broadcast %58 : f32 to vector<1x128xf32>
    %60 = arith.addf %57, %59 : vector<1x128xf32>
    %cst_14 = arith.constant 0.000000e+00 : f32
    %61 = vector.broadcast %cst_14 : f32 to vector<1x128xf32>
    %62 = arith.maximumf %60, %61 : vector<1x128xf32>
    %c3_15 = arith.constant 3 : index
    %63 = memref.load %arg3[%c3_15] : memref<4xf32, #tpu.memory_space<smem>>
    %64 = vector.broadcast %63 : f32 to vector<1x128xf32>
    %65 = arith.mulf %62, %64 : vector<1x128xf32>
    %66 = arith.addf %50, %65 : vector<1x128xf32>
    %c0_16 = arith.constant 0 : index
    %67 = memref.load %arg4[%c0_16] : memref<1xf32, #tpu.memory_space<smem>>
    %68 = vector.broadcast %67 : f32 to vector<1x128xf32>
    %69 = arith.addf %66, %68 : vector<1x128xf32>
    %cst_17 = arith.constant 0.000000e+00 : f32
    %70 = vector.broadcast %cst_17 : f32 to vector<1x128xf32>
    %71 = arith.subf %70, %69 : vector<1x128xf32>
    %72 = math.exp %71 : vector<1x128xf32>
    %cst_18 = arith.constant 1.000000e+00 : f32
    %73 = vector.broadcast %cst_18 : f32 to vector<1x128xf32>
    %74 = arith.addf %73, %72 : vector<1x128xf32>
    %75 = tpu.reciprocal %74 {approx = true} : vector<1x128xf32> -> vector<1x128xf32>
    %c0_19 = arith.constant 0 : index
    %c0_20 = arith.constant 0 : index
    %76 = vector.load %arg6[%c0_19, %c0_20] : memref<1x128xf32, #tpu.memory_space<vmem>>, vector<1x128xf32>
    tpu.vector_store %arg6[%c0_19, %c0_20], %75 {strides = array<i32>} : memref<1x128xf32, #tpu.memory_space<vmem>>, vector<1x128xf32>,
    return
  }
  func.func @transform_0(%arg0: i32, %arg1: memref<8xf32, #tpu.memory_space<smem>>, %arg2: memref<4xf32, #tpu.memory_space<smem>>, %arg3: memref<4xf32, #tpu.memory_space<smem>>, %arg4: memref<1xf32, #tpu.memory_space<smem>>) -> (i32, i32) {
    %c0_i32 = arith.constant 0 : i32
    %c0_i32_0 = arith.constant 0 : i32
    return %c0_i32, %arg0 : i32, i32
  }
  func.func @transform_1(%arg0: i32, %arg1: memref<8xf32, #tpu.memory_space<smem>>, %arg2: memref<4xf32, #tpu.memory_space<smem>>, %arg3: memref<4xf32, #tpu.memory_space<smem>>, %arg4: memref<1xf32, #tpu.memory_space<smem>>) -> (i32, i32) {
    %c0_i32 = arith.constant 0 : i32
    %c0_i32_0 = arith.constant 0 : i32
    return %c0_i32, %arg0 : i32, i32
  }
}

</mosaic_0001>

<llo_original>
// kernel: tpu_custom_call.1
$region0: #{tpu_custom_call.1}
  #allocation0 [shape = 'u32[]', space=smem, size = 0x4, offset = 0x4, fixed_abs, tag = 'smem constant byte address 0x4 - core index']
  #allocation1 [shape = 'u32[72,128]{1,0:T(1,128)}', space=vmem, size = 0x9000, scoped, tag = 'internal scratch']
  #allocation2 [shape = 's32[1]{0}', space=sflag, size = 0x4, scoped, tag = 'scoped memory for tpu_custom_call.1']
  #allocation3 [shape = 'u8[512]{0}', space=smem, size = 0x200, scoped, tag = 'prefetched SMEM operand 0']
  #allocation4 [shape = 'u8[512]{0}', space=smem, size = 0x200, scoped, tag = 'prefetched SMEM operand 1']
  #allocation5 [shape = 'u8[512]{0}', space=smem, size = 0x200, scoped, tag = 'prefetched SMEM operand 2']
  #allocation6 [shape = 'f32[1]{0:T(128)S(6)}', space=smem, size = 0x200, scoped, tag = 'prefetched SMEM operand 3']
  %s0 = inlined_call_operand.hbm [shape: f32[8], index: 0, kind: input, shape index: {}]
  %s1 = inlined_call_operand.hbm [shape: f32[4], index: 1, kind: input, shape index: {}]
  %s2 = inlined_call_operand.hbm [shape: f32[4], index: 2, kind: input, shape index: {}]
  %s3 = inlined_call_operand.<no memory space> [shape: f32[1], index: 3, kind: input, shape index: {}]
  %s4 = inlined_call_operand.vmem [shape: f32[2,256], index: 4, kind: input, shape index: {}]
  %s5 = inlined_call_operand.hbm [shape: f32[1,256], index: 5, kind: output, shape index: {}]
  %s6 = sld [smem:[#allocation0]]
  $region37: #{tpu_custom_call.1} parent=0
    _
  %s8 = ssub.s32 1, %s6
  %s9 = scalar_select 0, %s8, %s6
  %s11 = sshll.u32 %s0, 4
  %s12 = int_to_ptr.hbm [resolvable:$true] %s11
  %14 = dma.hbm_to_smem %s12, 16, [#allocation3], [#allocation2]
  %s16 = sshll.u32 %s1, 4
  %s17 = int_to_ptr.hbm [resolvable:$true] %s16
  %19 = dma.hbm_to_smem %s17, 16, [#allocation4], [#allocation2]
  %s21 = sshll.u32 %s2, 4
  %s22 = int_to_ptr.hbm [resolvable:$true] %s21
  %24 = dma.hbm_to_smem %s22, 16, [#allocation5], [#allocation2]
  %25 = sst [smem:[#allocation6]] %s3
  %27 = dma.done [#allocation2], 48
  %28 = sfence
  $region1: #{tpu_custom_call.1} parent=0
    #allocation7 [shape = 'u8[1024]{0}', space=vmem, size = 0x400, scoped, tag = 'output window, operand 0']
    #allocation8 [shape = 's32[2]{0}', space=sflag, size = 0x8, scoped, tag = 'scoped memory for tpu_custom_call.1']
    %29 = vsyncpa [#allocation8], 0
    %s30 = scalar_lea.sflag [#allocation8], 1
    %31 = vsyncpa %s30, 0
    loop: start=0, step=1, limit=4
    $region2: #{tpu_custom_call.1} parent=1 // loop_pre_header
      _
    $region3: #{tpu_custom_call.1} parent=1 // loop_header
      %s33 = sphi 0, %s37
      %p34 = scmp.ge.s32.totalorder %s33, 4
      %s43 = sphi 0, %s45
      %s46 = sphi 0, %s43
      %s47 = sphi 0, %s46
      %s63 = sphi 0, %s47
      %s69 = sphi 0, %s71
      %s72 = sphi 0, %s69
      %s73 = sphi 0, %s72
      %s89 = sphi 0, %s73
    $region4: #{tpu_custom_call.1} parent=1 // loop_header_branch
      %36 = sbr.rel (%p34) target = $region8
    $region5: #{tpu_custom_call.1} parent=1 // loop_body
      %s38 = ssub.s32 %s33, 1
      %s39 = ssub.s32 %s33, 2
      %s40 = sadd.s32 %s33, 1
      %s41 = ssub.s32 %s33, %s40
      %p42 = scmp.eq.s32.totalorder %s41, 0
      %s44 = sadd.s32 %s43, 1
      %s45 = scalar_select %p42, %s43, %s44
      %p48 = pneg %p42
      %p49 = scmp.eq.s32.totalorder %s33, 1
      %p50 = por %p48, %p49
      %p51 = scmp.ne.s32.totalorder %s43, %s46
      %p52 = scmp.eq.s32.totalorder %s33, 0
      %p53 = por %p51, %p52
      %p54 = scmp.ne.s32.totalorder %s43, %s46
      %p55 = scmp.eq.s32.totalorder %s38, 1
      %p56 = por %p54, %p55
      %p57 = scmp.ne.s32.totalorder %s46, %s47
      %p58 = scmp.eq.s32.totalorder %s38, 0
      %p59 = por %p57, %p58
      %p60 = scmp.ne.s32.totalorder %s46, %s47
      %p61 = scmp.eq.s32.totalorder %s39, 1
      %p62 = por %p60, %p61
      %p64 = scmp.ne.s32.totalorder %s47, %s63
      %p65 = scmp.eq.s32.totalorder %s39, 0
      %p66 = por %p64, %p65
      %s67 = ssub.s32 %s33, %s40
      %p68 = scmp.eq.s32.totalorder %s67, 0
      %s70 = sadd.s32 %s69, 1
      %s71 = scalar_select %p68, %s69, %s70
      %p74 = pneg %p68
      %p75 = scmp.eq.s32.totalorder %s33, 1
      %p76 = por %p74, %p75
      %p77 = scmp.ne.s32.totalorder %s69, %s72
      %p78 = scmp.eq.s32.totalorder %s33, 0
      %p79 = por %p77, %p78
      %p80 = scmp.ne.s32.totalorder %s69, %s72
      %p81 = scmp.eq.s32.totalorder %s38, 1
      %p82 = por %p80, %p81
      %p83 = scmp.ne.s32.totalorder %s72, %s73
      %p84 = scmp.eq.s32.totalorder %s38, 0
      %p85 = por %p83, %p84
      %p86 = scmp.ne.s32.totalorder %s72, %s73
      %p87 = scmp.eq.s32.totalorder %s39, 1
      %p88 = por %p86, %p87
      %p90 = scmp.ne.s32.totalorder %s73, %s89
      %p91 = scmp.eq.s32.totalorder %s39, 0
      %p92 = por %p90, %p91
      %p93 = scmp.le.s32.totalorder 1, %s33
      %p94 = scmp.lt.s32.totalorder %s33, 3
      %p95 = pnand %p93, %p94
      %p96 = pneg %p95
      // Predicated region
      $region9: #{tpu_custom_call.1} parent=5 // pred_check
        _
      $region10: #{tpu_custom_call.1} parent=5 // pred_check_branch
        %98 = sbr.rel (%p95) target = $region12
      $region11: #{tpu_custom_call.1} parent=5 // pred_region
        %s99 = ssub.s32 %s33, 1
      $region12: #{tpu_custom_call.1} parent=5 // pred_fallthru
        _
      %p100 = scmp.lt.s32.totalorder %s33, 2
      // Predicated region
      $region13: #{tpu_custom_call.1} parent=5 // pred_check
        %p101 = pneg %p100
      $region14: #{tpu_custom_call.1} parent=5 // pred_check_branch
        %103 = sbr.rel (%p101) target = $region16
      $region15: #{tpu_custom_call.1} parent=5 // pred_region
        // Predicated region
        $region17: #{tpu_custom_call.1} parent=15 // pred_check
          %p104 = pneg %p53
        $region18: #{tpu_custom_call.1} parent=15 // pred_check_branch
          %106 = sbr.rel (%p104) target = $region20
        $region19: #{tpu_custom_call.1} parent=15 // pred_region
          %p107 = scmp.lt.s32.totalorder %s33, 1
          %s108 = scalar_select %p107, %s33, 1
          %s109 = smul.addr %s108, 2
          %s110 = scalar_lea.vmem %s4, %s109
        $region20: #{tpu_custom_call.1} parent=15 // pred_fallthru
          _
      $region16: #{tpu_custom_call.1} parent=5 // pred_fallthru
        _
      %p111 = scmp.le.s32.totalorder 1, %s33
      %p112 = scmp.lt.s32.totalorder %s33, 3
      %p113 = pnand %p111, %p112
      %p114 = pneg %p113
      // Predicated region
      $region21: #{tpu_custom_call.1} parent=5 // pred_check
        _
      $region22: #{tpu_custom_call.1} parent=5 // pred_check_branch
        %116 = sbr.rel (%p113) target = $region24
      $region23: #{tpu_custom_call.1} parent=5 // pred_region
        %s117 = ssub.s32 %s33, 1
        %p118 = scmp.lt.s32.totalorder %s38, 1
        %s119 = scalar_select %p118, %s38, 1
        %s120 = smul.addr %s119, 2
        %s121 = scalar_lea.vmem %s4, %s120
        %p122 = pneg %p59
        %p123 = pneg %p56
        %p124 = pneg %p85
        %p125 = pneg %p82
        %s126 = sand.u32 %s72, 1
        %s127 = scalar_lea.sflag [#allocation8], %s126
        %s128 = sand.u32 %s72, 1
        %s129 = scalar_lea.vmem [#allocation7], %s128
        %p130 = scmp.lt.s32.totalorder %s38, 1
        %s131 = scalar_select %p130, %s38, 1
        %s132 = smul.addr %s131, 2
        %s133 = scalar_lea.vmem %s4, %s132
        %v134 = vld [vmem:[%s133] sm:$0x1]
        %v135 = vld [vmem:[%s133 + $0x1] sm:$0x1]
        %s136 = sld [smem:[#allocation3]]
        %v137 = vstv %s136
        %v138 = vmul.f32 %v134, %v137
        %s139 = sld [smem:[#allocation3 + $0x1]]
        %v140 = vstv %s139
        %v141 = vmul.f32 %v135, %v140
        %v142 = vadd.f32 %v138, %v141
        %s143 = sld [smem:[#allocation4]]
        %v144 = vstv %s143
        %v145 = vadd.f32 %v142, %v144
        %v146 = vmax.f32 %v145, 0.0
        %s147 = sld [smem:[#allocation5]]
        %v148 = vstv %s147
        %v149 = vmul.f32 %v146, %v148
        %v150 = vadd.f32 %v149, 0.0
        %s151 = sld [smem:[#allocation3 + $0x2]]
        %v152 = vstv %s151
        %v153 = vmul.f32 %v134, %v152
        %s154 = sld [smem:[#allocation3 + $0x3]]
        %v155 = vstv %s154
        %v156 = vmul.f32 %v135, %v155
        %v157 = vadd.f32 %v153, %v156
        %s158 = sld [smem:[#allocation4 + $0x1]]
        %v159 = vstv %s158
        %v160 = vadd.f32 %v157, %v159
        %v161 = vmax.f32 %v160, 0.0
        %s162 = sld [smem:[#allocation5 + $0x1]]
        %v163 = vstv %s162
        %v164 = vmul.f32 %v161, %v163
        %v165 = vadd.f32 %v150, %v164
        %s166 = sld [smem:[#allocation3 + $0x4]]
        %v167 = vstv %s166
        %v168 = vmul.f32 %v134, %v167
        %s169 = sld [smem:[#allocation3 + $0x5]]
        %v170 = vstv %s169
        %v171 = vmul.f32 %v135, %v170
        %v172 = vadd.f32 %v168, %v171
        %s173 = sld [smem:[#allocation4 + $0x2]]
        %v174 = vstv %s173
        %v175 = vadd.f32 %v172, %v174
        %v176 = vmax.f32 %v175, 0.0
        %s177 = sld [smem:[#allocation5 + $0x2]]
        %v178 = vstv %s177
        %v179 = vmul.f32 %v176, %v178
        %v180 = vadd.f32 %v165, %v179
        %s181 = sld [smem:[#allocation3 + $0x6]]
        %v182 = vstv %s181
        %v183 = vmul.f32 %v134, %v182
        %s184 = sld [smem:[#allocation3 + $0x7]]
        %v185 = vstv %s184
        %v186 = vmul.f32 %v135, %v185
        %v187 = vadd.f32 %v183, %v186
        %s188 = sld [smem:[#allocation4 + $0x3]]
        %v189 = vstv %s188
        %v190 = vadd.f32 %v187, %v189
        %v191 = vmax.f32 %v190, 0.0
        %s192 = sld [smem:[#allocation5 + $0x3]]
        %v193 = vstv %s192
        %v194 = vmul.f32 %v191, %v193
        %v195 = vadd.f32 %v180, %v194
        %s196 = sld [smem:[#allocation6]]
        %v197 = vstv %s196
        %v198 = vadd.f32 %v195, %v197
        %v199 = vsub.f32 0.0, %v198
        %v200 = vmul.f32 %v199, 1.442695
        %v201 = vpow.pop %v200
        %v202 = vadd.f32 %v201, 1.0
        %v203 = vrcp.pop %v202
        %204 = vst [vmem:[%s129] sm:$0x1] %v203
        %s205 = sand.u32 %s72, 1
        %s206 = scalar_lea.sflag [#allocation8], %s205
        %s207 = sand.u32 %s72, 1
        %s208 = scalar_lea.vmem [#allocation7], %s207
        // Predicated region
        $region25: #{tpu_custom_call.1} parent=23 // pred_check
          %p209 = pneg %p82
        $region26: #{tpu_custom_call.1} parent=23 // pred_check_branch
          %211 = sbr.rel (%p209) target = $region28
        $region27: #{tpu_custom_call.1} parent=23 // pred_region
          %213 = vsyncadd %s206, 0
          %s214 = scalar_lea.hbm %s5, %s38
          %s216 = sshll.u32 %s208, 4
          %s217 = int_to_ptr.vmem [resolvable:$true] %s216
          %s218 = sshll.u32 %s214, 4
          %s219 = int_to_ptr.hbm [resolvable:$true] %s218
          %221 = dma.vmem_to_hbm [thread:$0]  %s217, 16, %s219, %s206
        $region28: #{tpu_custom_call.1} parent=23 // pred_fallthru
          _
      $region24: #{tpu_custom_call.1} parent=5 // pred_fallthru
        _
      %p222 = scmp.le.s32.totalorder 2, %s33
      // Predicated region
      $region29: #{tpu_custom_call.1} parent=5 // pred_check
        %p223 = pneg %p222
      $region30: #{tpu_custom_call.1} parent=5 // pred_check_branch
        %225 = sbr.rel (%p223) target = $region32
      $region31: #{tpu_custom_call.1} parent=5 // pred_region
        %s226 = ssub.s32 %s33, 2
        // Predicated region
        $region33: #{tpu_custom_call.1} parent=31 // pred_check
          %p227 = pneg %p88
        $region34: #{tpu_custom_call.1} parent=31 // pred_check_branch
          %229 = sbr.rel (%p227) target = $region36
        $region35: #{tpu_custom_call.1} parent=31 // pred_region
          %s230 = sand.u32 %s73, 1
          %s231 = scalar_lea.sflag [#allocation8], %s230
          %s232 = sand.u32 %s73, 1
          %s233 = scalar_lea.vmem [#allocation7], %s232
          %235 = dma.done %s231, 16
        $region36: #{tpu_custom_call.1} parent=31 // pred_fallthru
          _
      $region32: #{tpu_custom_call.1} parent=5 // pred_fallthru
        _
    $region6: #{tpu_custom_call.1} parent=1 // loop_footer
      %s37 = sadd.s32 1, %s33
    $region7: #{tpu_custom_call.1} parent=1 // loop_footer_branch
      %32 = sbr.rel target = $region3
    $region8: #{tpu_custom_call.1} parent=1 // loop_exit
      _
    %236 = vsyncpa [#allocation8], 1
    %s237 = scalar_lea.sflag [#allocation8], 1
    %238 = vsyncpa %s237, 1

</llo_original>
